<compile_context>
chip_gen: v7x
topology: tpu7x:2x2x1
jax: 0.10.0
libtpu: 0.0.40
codegen_flags: <defaults>
</compile_context>

<pallas_src>
import functools
import math

import jax
import jax.numpy as jnp
from jax.experimental import pallas as pl
from jax.experimental.pallas import tpu as pltpu

_MIB = 1024 * 1024


def _round_up(x, m):
    return ((x + m - 1) // m) * m


def _nbytes(shape, dtype):
    return int(math.prod(shape)) * jnp.dtype(dtype).itemsize


def _vmem_capacity_bytes():
    """Physical VMEM per TensorCore; conservative fallback if query fails."""
    try:
        return int(pltpu.get_tpu_info().vmem_capacity_bytes)
    except Exception:
        return 64 * _MIB  # v7x-sized, safe on every generation


def _vmem_estimate(tm, tk, hidden, ffn_pad, x_dt, w_dt, b1_dt, b2_dt, out_dt):
    """Working-set estimate (double-buffered streaming blocks + scratch)."""
    return (
        2 * _nbytes((tm, hidden), x_dt)        # x row tile
        + 2 * _nbytes((hidden, tk), w_dt)      # W1 chunk
        + 2 * _nbytes((tk, hidden), w_dt)      # W2 chunk
        + 2 * _nbytes((ffn_pad,), b1_dt)       # b1 (resident, DMA'd once)
        + 2 * _nbytes((1, hidden), b2_dt)      # b2 (resident, DMA'd once)
        + 2 * _nbytes((tm, hidden), out_dt)    # output tile
        + _nbytes((tm, hidden), jnp.float32)   # f32 accumulator scratch
        + _nbytes((tm, tk), jnp.float32)       # layer-1 / GELU intermediate
    )


def _select_tiles(M, hidden, ffn, x_dt, w_dt, b1_dt, b2_dt, out_dt,
                  vmem_budget, want_multi_row_tiles, tm_req, tk_req):
    """Pick (tm, tk, ffn_pad, vmem_est): maximize tm first (main lever against
    weight re-streaming), then tk, under the VMEM budget."""
    if tk_req is not None:
        tk_cands = [tk_req]
    elif ffn <= 512:
        tk_cands = [ffn]
    else:
        tk_cands = [512, 256, 128]

    cap_rows = _round_up(M, 8)
    if want_multi_row_tiles and M >= 512:
        # Small-VMEM parts (v7x) have 2 TensorCores sharded over the
        # "parallel" row axis: keep at least two row tiles when feasible.
        cap_rows = min(cap_rows, max(128, _round_up((M + 1) // 2, 128)))

    if tm_req is not None:
        tm_cands = [min(_round_up(tm_req, 8), cap_rows)]
    else:
        tm_cands, seen = [], set()
        for c in (2048, 1024, 512, 256, 128, 64, 32, 16, 8):
            t = min(c, cap_rows)
            if t not in seen:
                seen.add(t)
                tm_cands.append(t)

    best = None
    for tm in tm_cands:                      # largest row tile first
        for tk_c in tk_cands:                # then largest ffn chunk
            if ffn <= tk_c:
                tk, ffn_pad = ffn, ffn
            else:
                tk = _round_up(tk_c, 128)
                ffn_pad = _round_up(ffn, tk)
            est = _vmem_estimate(tm, tk, hidden, ffn_pad,
                                 x_dt, w_dt, b1_dt, b2_dt, out_dt)
            cand = (tm, tk, ffn_pad, est)
            if est <= vmem_budget:
                return cand
            if best is None or est < best[3]:
                best = cand
    return best  # nothing fit the budget: return the smallest footprint found


def ffn_kernel(x_ref, w1_ref, b1_ref, w2_ref, b2_ref, o_ref, acc_ref, *,
               approximate_gelu):
    # x_ref : (tm, hidden)      input row tile (native/compute dtype)
    # w1_ref: (hidden, tk)      layer-1 weight chunk (streamed over k)
    # b1_ref: (n_k, tk)         full layer-1 bias, VMEM-resident
    # w2_ref: (tk, hidden)      layer-2 weight chunk (streamed over k)
    # b2_ref: (1, hidden)       layer-2 bias, VMEM-resident
    # o_ref : (tm, hidden)      output tile (written once, on the last k)
    # acc_ref:(tm, hidden) f32  accumulator scratch
    k = pl.program_id(1)

    @pl.when(k == 0)
    def _init():
        # Fold the layer-2 bias into the accumulator initialization.
        acc_ref[...] = jnp.broadcast_to(
            b2_ref[...].astype(jnp.float32), acc_ref.shape)

    # layer1 chunk: x @ W1[:, k*tk:(k+1)*tk] + b1[k*tk:(k+1)*tk]   (MXU, f32 acc)
    h = jnp.dot(x_ref[...], w1_ref[...], preferred_element_type=jnp.float32)
    b1_chunk = b1_ref[pl.ds(k, 1), :]            # (1, tk) row of resident bias
    h = h + b1_chunk.astype(jnp.float32)

    if approximate_gelu:
        # tanh-approx GELU: transcendental lands on the EUP slot.
        c = math.sqrt(2.0 / math.pi)
        h = 0.5 * h * (1.0 + jnp.tanh(c * (h + 0.044715 * h * h * h)))
    else:
        # exact (erf) GELU -- matches nn.GELU() default.
        h = 0.5 * h * (1.0 + jax.lax.erf(h * (1.0 / math.sqrt(2.0))))

    # layer2 chunk: acc += gelu(h) @ W2[k*tk:(k+1)*tk, :]          (MXU, f32 acc)
    acc_ref[...] += jnp.dot(h.astype(w2_ref.dtype), w2_ref[...],
                            preferred_element_type=jnp.float32)

    @pl.when(k == pl.num_programs(1) - 1)
    def _finalize():
        o_ref[...] = acc_ref[...].astype(o_ref.dtype)


def feed_forward_network(x, w1, b1, w2, b2, *, tm=None, tk=None,
                         compute_dtype=None, approximate_gelu=False):
    """x: [batch, seq, hidden]; w1: [hidden, ffn]; b1: [ffn];
    w2: [ffn, hidden]; b2: [hidden]."""
    batch, seq, hidden = x.shape
    hidden_in, ffn = w1.shape
    assert hidden_in == hidden and w2.shape == (ffn, hidden)
    assert b1.shape == (ffn,) and b2.shape == (hidden,)

    out_dtype = x.dtype
    M = batch * seq
    x2d = x.reshape(M, hidden)

    # Optional precision/bandwidth trade (recommended on v6e/v7x for f32 inputs):
    # halves weight HBM bytes and runs the MXU at full bf16 rate; accumulation
    # stays f32 inside the kernel.
    if compute_dtype is not None:
        x2d = x2d.astype(compute_dtype)
        w1 = w1.astype(compute_dtype)
        w2 = w2.astype(compute_dtype)

    # --- generation-aware VMEM budget and tile selection -------------------
    vmem_cap = _vmem_capacity_bytes()
    vmem_budget = int(vmem_cap * 0.8)                 # leave compiler headroom
    want_multi_row_tiles = vmem_cap <= 96 * _MIB      # v7x-like: 2 TCs / chip

    tm, tk, ffn_pad, vmem_est = _select_tiles(
        M, hidden, ffn, x2d.dtype, w1.dtype, b1.dtype, b2.dtype, out_dtype,
        vmem_budget, want_multi_row_tiles, tm, tk)

    # --- row padding --------------------------------------------------------
    m_pad = _round_up(M, tm)
    if m_pad != M:
        x2d = jnp.pad(x2d, ((0, m_pad - M), (0, 0)))

    # --- ffn padding (zero-padded columns/rows contribute exactly 0) --------
    w1p, b1p, w2p = w1, b1, w2
    if ffn_pad != ffn:
        w1p = jnp.pad(w1, ((0, 0), (0, ffn_pad - ffn)))
        b1p = jnp.pad(b1, ((0, ffn_pad - ffn),))
        w2p = jnp.pad(w2, ((0, ffn_pad - ffn), (0, 0)))

    n_k = ffn_pad // tk
    b1_2d = b1p.reshape(n_k, tk)        # row k == bias for ffn chunk k (resident)
    b2_2d = b2.reshape(1, hidden)

    grid = (m_pad // tm, n_k)
    num_i = grid[0]

    vmem_limit = int(min(vmem_cap - 4 * _MIB,
                         max(32 * _MIB, int(vmem_est * 1.25) + 2 * _MIB)))

    # Real traffic: activations once, weights re-streamed once per row tile.
    cost = pl.CostEstimate(
        flops=int(4 * m_pad * hidden * ffn_pad),
        transcendentals=int(m_pad * ffn_pad),
        bytes_accessed=int(
            _nbytes((m_pad, hidden), x2d.dtype)
            + _nbytes((m_pad, hidden), out_dtype)
            + num_i * (_nbytes((hidden, ffn_pad), w1p.dtype)
                       + _nbytes((ffn_pad, hidden), w2p.dtype))
            + _nbytes((ffn_pad,), b1p.dtype)
            + _nbytes((hidden,), b2.dtype)),
    )

    kernel = functools.partial(ffn_kernel, approximate_gelu=approximate_gelu)

    out2d = pl.pallas_call(
        kernel,
        out_shape=jax.ShapeDtypeStruct((m_pad, hidden), out_dtype),
        grid_spec=pltpu.PrefetchScalarGridSpec(
            num_scalar_prefetch=0,
            grid=grid,
            in_specs=[
                pl.BlockSpec((tm, hidden), lambda i, k: (i, 0)),   # x row tile
                pl.BlockSpec((hidden, tk), lambda i, k: (0, k)),   # W1 chunk
                pl.BlockSpec((n_k, tk), lambda i, k: (0, 0)),      # b1 resident
                pl.BlockSpec((tk, hidden), lambda i, k: (k, 0)),   # W2 chunk
                pl.BlockSpec((1, hidden), lambda i, k: (0, 0)),    # b2 resident
            ],
            out_specs=pl.BlockSpec((tm, hidden), lambda i, k: (i, 0)),
            scratch_shapes=[pltpu.VMEM((tm, hidden), jnp.float32)],
        ),
        compiler_params=pltpu.CompilerParams(
            dimension_semantics=("parallel", "arbitrary"),
            vmem_limit_bytes=vmem_limit,
        ),
        cost_estimate=cost,
    )(x2d, w1p, b1_2d, w2p, b2_2d)

    return out2d[:M].reshape(batch, seq, hidden)


def init_params(key, hidden_size, ffn_size, dtype=jnp.float32):
    """Deterministic init mimicking nn.Linear's default (uniform +- 1/sqrt(fan_in))."""
    k1, k2, k3, k4 = jax.random.split(key, 4)
    bound1 = 1.0 / math.sqrt(hidden_size)
    bound2 = 1.0 / math.sqrt(ffn_size)
    # PyTorch Linear weight is [out, in]; we keep [in, out] for the kernel.
    w1 = jax.random.uniform(k1, (hidden_size, ffn_size), dtype, -bound1, bound1)
    b1 = jax.random.uniform(k2, (ffn_size,), dtype, -bound1, bound1)
    w2 = jax.random.uniform(k3, (ffn_size, hidden_size), dtype, -bound2, bound2)
    b2 = jax.random.uniform(k4, (hidden_size,), dtype, -bound2, bound2)
    return w1, b1, w2, b2


def _reference(x, w1, b1, w2, b2):
    h = jnp.dot(x, w1) + b1
    h = 0.5 * h * (1.0 + jax.lax.erf(h / math.sqrt(2.0)))
    return jnp.dot(h, w2) + b2


# NOTE: the PyTorch module takes a dropout_rate but never applies dropout in
# forward(), so no dropout is implemented here.
if __name__ == "__main__":
    key = jax.random.PRNGKey(0)
    kx, kp, kx2, kp2 = jax.random.split(key, 4)

    # --- Test 1: small shapes, single ffn chunk, auto tile selection. -------
    hidden_size, ffn_size = 32, 64
    batch, seq = 2, 8
    x = jax.random.normal(kx, (batch, seq, hidden_size), dtype=jnp.float32)
    w1, b1, w2, b2 = init_params(kp, hidden_size, ffn_size)

    out = jax.block_until_ready(feed_forward_network(x, w1, b1, w2, b2))
    ref = _reference(x, w1, b1, w2, b2)
    assert out.shape == (batch, seq, hidden_size)
    assert jnp.allclose(out, ref, atol=1e-5, rtol=1e-5), "mismatch vs reference (test 1)"

    # --- Test 2: multiple row tiles, multiple ffn chunks, ffn padding. ------
    hidden_size2, ffn_size2 = 32, 200
    batch2, seq2 = 2, 24
    x2 = jax.random.normal(kx2, (batch2, seq2, hidden_size2), dtype=jnp.float32)
    w1b, b1b, w2b, b2b = init_params(kp2, hidden_size2, ffn_size2)

    out2 = jax.block_until_ready(
        feed_forward_network(x2, w1b, b1b, w2b, b2b, tm=16, tk=128))
    ref2 = _reference(x2, w1b, b1b, w2b, b2b)
    assert out2.shape == (batch2, seq2, hidden_size2)
    assert jnp.allclose(out2, ref2, atol=1e-5, rtol=1e-5), "mismatch vs reference (test 2)"

    print("KERNEL_OK")
</pallas_src>

<mosaic_0001>
module attributes {stable_mosaic.version = 11 : i64} {
  func.func @ffn_kernel(%arg0: i32, %arg1: i32, %arg2: memref<16x32xf32, #tpu.memory_space<vmem>>, %arg3: memref<32x64xf32, #tpu.memory_space<vmem>>, %arg4: memref<1x64xf32, #tpu.memory_space<vmem>>, %arg5: memref<64x32xf32, #tpu.memory_space<vmem>>, %arg6: memref<1x32xf32, #tpu.memory_space<vmem>>, %arg7: memref<16x32xf32, #tpu.memory_space<vmem>>, %arg8: memref<16x32xf32, #tpu.memory_space<vmem>>) attributes {dimension_semantics = [#tpu.dimension_semantics<parallel>, #tpu.dimension_semantics<arbitrary>], iteration_bounds = array<i64: 1, 1>, scalar_prefetch = 0 : i64, scratch_operands = 1 : i64, tpu.core_type = #tpu.core_type<tc>, window_params = [{transform_indices = @transform_0, window_bounds = array<i64: 16, 32>}, {transform_indices = @transform_1, window_bounds = array<i64: 32, 64>}, {pipeline_mode = #tpu.pipeline_mode<synchronous>, transform_indices = @transform_2, window_bounds = array<i64: 1, 64>}, {transform_indices = @transform_3, window_bounds = array<i64: 64, 32>}, {pipeline_mode = #tpu.pipeline_mode<synchronous>, transform_indices = @transform_4, window_bounds = array<i64: 1, 32>}, {transform_indices = @transform_5, window_bounds = array<i64: 16, 32>}]} {
    %c0_i32 = arith.constant 0 : i32
    %0 = arith.cmpi eq, %arg1, %c0_i32 : i32
    %1 = arith.extui %0 : i1 to i32
    %c0_i32_0 = arith.constant 0 : i32
    %2 = arith.cmpi ne, %1, %c0_i32_0 : i32
    scf.if %2 {
      %c0_17 = arith.constant 0 : index
      %c0_18 = arith.constant 0 : index
      %26 = vector.load %arg6[%c0_17, %c0_18] : memref<1x32xf32, #tpu.memory_space<vmem>>, vector<1x32xf32>
      %27 = vector.shape_cast %26 : vector<1x32xf32> to vector<1x32xf32>
      %28 = vector.broadcast %27 : vector<1x32xf32> to vector<16x32xf32>
      %c0_19 = arith.constant 0 : index
      %c0_20 = arith.constant 0 : index
      %29 = vector.load %arg8[%c0_19, %c0_20] : memref<16x32xf32, #tpu.memory_space<vmem>>, vector<16x32xf32>
      tpu.vector_store %arg8[%c0_19, %c0_20], %28 {strides = array<i32>} : memref<16x32xf32, #tpu.memory_space<vmem>>, vector<16x32xf32>,
    } else {
    }
    %c0 = arith.constant 0 : index
    %c0_1 = arith.constant 0 : index
    %3 = vector.load %arg2[%c0, %c0_1] : memref<16x32xf32, #tpu.memory_space<vmem>>, vector<16x32xf32>
    %c0_2 = arith.constant 0 : index
    %c0_3 = arith.constant 0 : index
    %4 = vector.load %arg3[%c0_2, %c0_3] : memref<32x64xf32, #tpu.memory_space<vmem>>, vector<32x64xf32>
    %cst = arith.constant dense<0.000000e+00> : vector<16x64xf32>
    %5 = tpu.matmul %3, %4, %cst {dimension_numbers = #tpu.dot_dimension_numbers<[1], [0], [0], [1], [0, 0, 1, 1], [], []>} : vector<16x32xf32>, vector<32x64xf32>, vector<16x64xf32> -> vector<16x64xf32>
    %6 = arith.index_cast %arg1 : i32 to index
    %c0_4 = arith.constant 0 : index
    %7 = vector.load %arg4[%6, %c0_4] : memref<1x64xf32, #tpu.memory_space<vmem>>, vector<1x64xf32>
    %8 = vector.broadcast %7 : vector<1x64xf32> to vector<16x64xf32>
    %9 = arith.addf %5, %8 : vector<16x64xf32>
    %cst_5 = arith.constant 5.000000e-01 : f32
    %10 = vector.broadcast %cst_5 : f32 to vector<16x64xf32>
    %11 = arith.mulf %10, %9 : vector<16x64xf32>
    %cst_6 = arith.constant 0.707106769 : f32
    %12 = vector.broadcast %cst_6 : f32 to vector<16x64xf32>
    %13 = arith.mulf %9, %12 : vector<16x64xf32>
    %14 = math.erf %13 : vector<16x64xf32>
    %cst_7 = arith.constant 1.000000e+00 : f32
    %15 = vector.broadcast %cst_7 : f32 to vector<16x64xf32>
    %16 = arith.addf %15, %14 : vector<16x64xf32>
    %17 = arith.mulf %11, %16 : vector<16x64xf32>
    %c0_8 = arith.constant 0 : index
    %c0_9 = arith.constant 0 : index
    %18 = vector.load %arg8[%c0_8, %c0_9] : memref<16x32xf32, #tpu.memory_space<vmem>>, vector<16x32xf32>
    %c0_10 = arith.constant 0 : index
    %c0_11 = arith.constant 0 : index
    %19 = vector.load %arg5[%c0_10, %c0_11] : memref<64x32xf32, #tpu.memory_space<vmem>>, vector<64x32xf32>
    %cst_12 = arith.constant dense<0.000000e+00> : vector<16x32xf32>
    %20 = tpu.matmul %17, %19, %cst_12 {dimension_numbers = #tpu.dot_dimension_numbers<[1], [0], [0], [1], [0, 0, 1, 1], [], []>} : vector<16x64xf32>, vector<64x32xf32>, vector<16x32xf32> -> vector<16x32xf32>
    %21 = arith.addf %18, %20 : vector<16x32xf32>
    %c0_13 = arith.constant 0 : index
    %c0_14 = arith.constant 0 : index
    %22 = vector.load %arg8[%c0_13, %c0_14] : memref<16x32xf32, #tpu.memory_space<vmem>>, vector<16x32xf32>
    tpu.vector_store %arg8[%c0_13, %c0_14], %21 {strides = array<i32>} : memref<16x32xf32, #tpu.memory_space<vmem>>, vector<16x32xf32>,
    %c0_i32_15 = arith.constant 0 : i32
    %23 = arith.cmpi eq, %arg1, %c0_i32_15 : i32
    %24 = arith.extui %23 : i1 to i32
    %c0_i32_16 = arith.constant 0 : i32
    %25 = arith.cmpi ne, %24, %c0_i32_16 : i32
    scf.if %25 {
      %c0_17 = arith.constant 0 : index
      %c0_18 = arith.constant 0 : index
      %26 = vector.load %arg8[%c0_17, %c0_18] : memref<16x32xf32, #tpu.memory_space<vmem>>, vector<16x32xf32>
      %c0_19 = arith.constant 0 : index
      %c0_20 = arith.constant 0 : index
      %27 = vector.load %arg7[%c0_19, %c0_20] : memref<16x32xf32, #tpu.memory_space<vmem>>, vector<16x32xf32>
      tpu.vector_store %arg7[%c0_19, %c0_20], %26 {strides = array<i32>} : memref<16x32xf32, #tpu.memory_space<vmem>>, vector<16x32xf32>,
    } else {
    }
    return
  }
  func.func @transform_0(%arg0: i32, %arg1: i32) -> (i32, i32) {
    %c0_i32 = arith.constant 0 : i32
    %c0_i32_0 = arith.constant 0 : i32
    return %arg0, %c0_i32 : i32, i32
  }
  func.func @transform_1(%arg0: i32, %arg1: i32) -> (i32, i32) {
    %c0_i32 = arith.constant 0 : i32
    %c0_i32_0 = arith.constant 0 : i32
    return %c0_i32, %arg1 : i32, i32
  }
  func.func @transform_2(%arg0: i32, %arg1: i32) -> (i32, i32) {
    %c0_i32 = arith.constant 0 : i32
    %c0_i32_0 = arith.constant 0 : i32
    %c0_i32_1 = arith.constant 0 : i32
    return %c0_i32, %c0_i32_0 : i32, i32
  }
  func.func @transform_3(%arg0: i32, %arg1: i32) -> (i32, i32) {
    %c0_i32 = arith.constant 0 : i32
    %c0_i32_0 = arith.constant 0 : i32
    return %arg1, %c0_i32 : i32, i32
  }
  func.func @transform_4(%arg0: i32, %arg1: i32) -> (i32, i32) {
    %c0_i32 = arith.constant 0 : i32
    %c0_i32_0 = arith.constant 0 : i32
    %c0_i32_1 = arith.constant 0 : i32
    return %c0_i32, %c0_i32_0 : i32, i32
  }
  func.func @transform_5(%arg0: i32, %arg1: i32) -> (i32, i32) {
    %c0_i32 = arith.constant 0 : i32
    %c0_i32_0 = arith.constant 0 : i32
    return %arg0, %c0_i32 : i32, i32
  }
}

</mosaic_0001>

<llo_original>
// kernel: tpu_custom_call.1
$region0: #{tpu_custom_call.1}
  #allocation0 [shape = 'u32[]', space=smem, size = 0x4, offset = 0x4, fixed_abs, tag = 'smem constant byte address 0x4 - core index']
  #allocation1 [shape = 'u32[144,128]{1,0:T(1,128)}', space=vmem, size = 0x12000, scoped, tag = 'internal scratch']
  #allocation2 [shape = 'f32[16,32]{1,0:T(8,128)}', space=vmem, size = 0x2000, scoped, tag = 'scratch operand']
  %s0 = inlined_call_operand.vmem [shape: f32[16,32], index: 0, kind: input, shape index: {}]
  %s1 = inlined_call_operand.vmem [shape: f32[32,64], index: 1, kind: input, shape index: {}]
  %s2 = inlined_call_operand.vmem [shape: f32[1,64], index: 2, kind: input, shape index: {}]
  %s3 = inlined_call_operand.vmem [shape: f32[64,32], index: 3, kind: input, shape index: {}]
  %s4 = inlined_call_operand.vmem [shape: f32[1,32], index: 4, kind: input, shape index: {}]
  %s5 = inlined_call_operand.hbm [shape: f32[16,32], index: 5, kind: output, shape index: {}]
  %s6 = sld [smem:[#allocation0]]
  $region38: #{tpu_custom_call.1} parent=0
    _
  %s8 = ssub.s32 1, %s6
  %s9 = scalar_select 0, %s8, %s6
  $region1: #{tpu_custom_call.1} parent=0
    #allocation3 [shape = 'u8[8192]{0}', space=vmem, size = 0x2000, scoped, tag = 'output window, operand 0, single buffered']
    #allocation4 [shape = 's32[1]{0}', space=sflag, size = 0x4, scoped, tag = 'scoped memory for tpu_custom_call.1']
    %10 = vsyncpa [#allocation4], 0
    // Predicated region
    $region2: #{tpu_custom_call.1} parent=1 // pred_check
      _
    $region3: #{tpu_custom_call.1} parent=1 // pred_check_branch
      %12 = sbr.rel (0) target = $region5
    $region4: #{tpu_custom_call.1} parent=1 // pred_region
      _
    $region5: #{tpu_custom_call.1} parent=1 // pred_fallthru
      _
    // Predicated region
    $region6: #{tpu_custom_call.1} parent=1 // pred_check
      _
    $region7: #{tpu_custom_call.1} parent=1 // pred_check_branch
      %14 = sbr.rel (0) target = $region9
    $region8: #{tpu_custom_call.1} parent=1 // pred_region
      _
    $region9: #{tpu_custom_call.1} parent=1 // pred_fallthru
      _
    // Predicated region
    $region10: #{tpu_custom_call.1} parent=1 // pred_check
      _
    $region11: #{tpu_custom_call.1} parent=1 // pred_check_branch
      %16 = sbr.rel (0) target = $region13
    $region12: #{tpu_custom_call.1} parent=1 // pred_region
      _
    $region13: #{tpu_custom_call.1} parent=1 // pred_fallthru
      _
    // Predicated region
    $region14: #{tpu_custom_call.1} parent=1 // pred_check
      _
    $region15: #{tpu_custom_call.1} parent=1 // pred_check_branch
      %18 = sbr.rel (0) target = $region17
    $region16: #{tpu_custom_call.1} parent=1 // pred_region
      _
    $region17: #{tpu_custom_call.1} parent=1 // pred_fallthru
      _
    // Predicated region
    $region18: #{tpu_custom_call.1} parent=1 // pred_check
      _
    $region19: #{tpu_custom_call.1} parent=1 // pred_check_branch
      %20 = sbr.rel (0) target = $region21
    $region20: #{tpu_custom_call.1} parent=1 // pred_region
      _
    $region21: #{tpu_custom_call.1} parent=1 // pred_fallthru
      _
    %p21 = scmp.eq.s32.totalorder 0, 0
    // Predicated region
    $region22: #{tpu_custom_call.1} parent=1 // pred_check
      %p22 = pneg %p21
    $region23: #{tpu_custom_call.1} parent=1 // pred_check_branch
      %24 = sbr.rel (%p22) target = $region25
    $region24: #{tpu_custom_call.1} parent=1 // pred_region
      %v25 = vld [vmem:[%s4] sm:$0x1]
      %v27 = vlaneseq
      %v28 = vshrl.u32 %v27, 7
      %v29 = vsub.s32 0, %v28
      %v30 = vrot.slane %v25, %v29
      %vm32 = vcmask 261120
      %33 = vst.msk [vmem:[#allocation2] sm:$0xff] %vm32, %v30
      %34 = vst.msk [vmem:[#allocation2 + $0x8] sm:$0xff] %vm32, %v30
    $region25: #{tpu_custom_call.1} parent=1 // pred_fallthru
      _
    %v35 = vld [vmem:[%s0] sm:$0xff]
    %v36 = vld [vmem:[%s0 + $0x8] sm:$0xff]
    %v37 = vld [vmem:[%s1] sm:$0xff]
    %v38 = vld [vmem:[%s1 + $0x8] sm:$0xff]
    %v39 = vld [vmem:[%s1 + $0x10] sm:$0xff]
    %v40 = vld [vmem:[%s1 + $0x18] sm:$0xff]
    %v41 = vld [vmem:[%s2] sm:$0x1]
    %v43 = vlaneseq
    %v44 = vshrl.u32 %v43, 7
    %v45 = vsub.s32 0, %v44
    %v46 = vrot.slane %v41, %v45
    %vm48 = vcmask 261120
    %v50 = vsel %vm48, %v35, 0
    %v53 = vsel %vm48, %v36, 0
    %55 = vmatprep.subr.mxu0 0.0
    %56 = vmatpush1.msra.mxu0 %v37
    %57 = vmatprep.subr.mxu0 0.0
    %58 = vmatpush1.msra.mxu0 %v38
    %59 = vmatprep.subr.mxu0 0.0
    %60 = vmatpush1.msra.mxu0 %v39
    %61 = vmatprep.subr.mxu0 0.0
    %62 = vmatpush1.msra.mxu0 %v40
    %63 = vmatprep.subr.mxu0 0.0
    %64 = vmatpush1.msra.mxu0 0.0
    %65 = vmatprep.subr.mxu0 0.0
    %66 = vmatpush1.msra.mxu0 0.0
    %67 = vmatprep.subr.mxu0 0.0
    %68 = vmatpush1.msra.mxu0 0.0
    %69 = vmatprep.subr.mxu0 0.0
    %70 = vmatpush1.msra.mxu0 0.0
    %71 = vmatprep.subr.mxu0 0.0
    %72 = vmatpush1.msra.mxu0 0.0
    %73 = vmatprep.subr.mxu0 0.0
    %74 = vmatpush1.msra.mxu0 0.0
    %75 = vmatprep.subr.mxu0 0.0
    %76 = vmatpush1.msra.mxu0 0.0
    %77 = vmatprep.subr.mxu0 0.0
    %78 = vmatpush1.msra.mxu0 0.0
    %79 = vmatprep.subr.mxu0 0.0
    %80 = vmatpush1.msra.mxu0 0.0
    %81 = vmatprep.subr.mxu0 0.0
    %82 = vmatpush1.msra.mxu0 0.0
    %83 = vmatprep.subr.mxu0 0.0
    %84 = vmatpush1.msra.mxu0 0.0
    %85 = vmatprep.subr.mxu0 0.0
    %86 = vmatpush1.msra.mxu0 0.0
    %87 = vmatprep.subr.mxu0 0.0
    %88 = vmatpush1.msra.mxu0 0.0
    %89 = vmatprep.subr.mxu0 0.0
    %90 = vmatpush1.msra.mxu0 0.0
    %91 = vmatprep.subr.mxu0 0.0
    %92 = vmatpush1.msra.mxu0 0.0
    %93 = vmatprep.subr.mxu0 0.0
    %94 = vmatpush1.msra.mxu0 0.0
    %95 = vmatprep.subr.mxu0 0.0
    %96 = vmatpush1.msra.mxu0 0.0
    %97 = vmatprep.subr.mxu0 0.0
    %98 = vmatpush1.msra.mxu0 0.0
    %99 = vmatprep.subr.mxu0 0.0
    %100 = vmatpush1.msra.mxu0 0.0
    %101 = vmatprep.subr.mxu0 0.0
    %102 = vmatpush1.msra.mxu0 0.0
    %103 = vmatprep.subr.mxu0 0.0
    %104 = vmatpush1.msra.mxu0 0.0
    %105 = vmatprep.subr.mxu0 0.0
    %106 = vmatpush1.msra.mxu0 0.0
    %107 = vmatprep.subr.mxu0 0.0
    %108 = vmatpush1.msra.mxu0 0.0
    %109 = vmatprep.subr.mxu0 0.0
    %110 = vmatpush1.msra.mxu0 0.0
    %111 = vmatprep.subr.mxu0 0.0
    %112 = vmatpush1.msra.mxu0 0.0
    %113 = vmatprep.subr.mxu0 0.0
    %114 = vmatpush1.msra.mxu0 0.0
    %115 = vmatprep.subr.mxu0 0.0
    %116 = vmatpush1.msra.mxu0 0.0
    %117 = vmatprep.subr.mxu0 0.0
    %118 = vmatpush1.msra.mxu0 0.0
    %119 = vmatprep.mubr.f32.mxu0 0.0
    %120 = vmatmul.mubr.f32.gmra.mrb[0].mxu0 %v50
    %v121 = vpop.f32.mrb[0].mxu0
    %v122 = vadd.f32 %v46, %v121
    %v123 = vpop.f32.mrb[0].mxu0
    %124 = vmatprep.mubr.f32.mxu0 0.0
    %125 = vmatmul.mubr.f32.gmra.mrb[0].mxu0 %v53
    %v126 = vpop.f32.mrb[0].mxu0
    %v127 = vadd.f32 %v46, %v126
    %v128 = vpop.f32.mrb[0].mxu0
    %129 = vdwg.mxu0
    %v130 = vmul.f32 %v122, 0.5
    %v131 = vmul.f32 %v127, 0.5
    %v132 = vmul.f32 %v122, 0.70710677
    %v133 = vmul.f32 %v127, 0.70710677
    %v134 = verf.f32.pop %v132
    %v135 = verf.f32.pop %v133
    %v136 = vadd.f32 %v134, 1.0
    %v137 = vadd.f32 %v135, 1.0
    %v138 = vmul.f32 %v130, %v136
    %v139 = vmul.f32 %v131, %v137
    %v140 = vld [vmem:[#allocation2] sm:$0xff]
    %v141 = vld [vmem:[#allocation2 + $0x8] sm:$0xff]
    %v142 = vld [vmem:[%s3] sm:$0xff]
    %v143 = vld [vmem:[%s3 + $0x8] sm:$0xff]
    %v144 = vld [vmem:[%s3 + $0x10] sm:$0xff]
    %v145 = vld [vmem:[%s3 + $0x18] sm:$0xff]
    %v146 = vld [vmem:[%s3 + $0x20] sm:$0xff]
    %v147 = vld [vmem:[%s3 + $0x28] sm:$0xff]
    %v148 = vld [vmem:[%s3 + $0x30] sm:$0xff]
    %v149 = vld [vmem:[%s3 + $0x38] sm:$0xff]
    %vm150 = vcmask 523264
    %v152 = vsel %vm150, %v138, 0
    %v155 = vsel %vm150, %v139, 0
    %157 = vmatprep.subr.mxu0 0.0
    %158 = vmatpush1.msra.mxu0 %v142
    %159 = vmatprep.subr.mxu0 0.0
    %160 = vmatpush1.msra.mxu0 %v143
    %161 = vmatprep.subr.mxu0 0.0
    %162 = vmatpush1.msra.mxu0 %v144
    %163 = vmatprep.subr.mxu0 0.0
    %164 = vmatpush1.msra.mxu0 %v145
    %165 = vmatprep.subr.mxu0 0.0
    %166 = vmatpush1.msra.mxu0 %v146
    %167 = vmatprep.subr.mxu0 0.0
    %168 = vmatpush1.msra.mxu0 %v147
    %169 = vmatprep.subr.mxu0 0.0
    %170 = vmatpush1.msra.mxu0 %v148
    %171 = vmatprep.subr.mxu0 0.0
    %172 = vmatpush1.msra.mxu0 %v149
    %173 = vmatprep.subr.mxu0 0.0
    %174 = vmatpush1.msra.mxu0 0.0
    %175 = vmatprep.subr.mxu0 0.0
    %176 = vmatpush1.msra.mxu0 0.0
    %177 = vmatprep.subr.mxu0 0.0
    %178 = vmatpush1.msra.mxu0 0.0
    %179 = vmatprep.subr.mxu0 0.0
    %180 = vmatpush1.msra.mxu0 0.0
    %181 = vmatprep.subr.mxu0 0.0
    %182 = vmatpush1.msra.mxu0 0.0
    %183 = vmatprep.subr.mxu0 0.0
    %184 = vmatpush1.msra.mxu0 0.0
    %185 = vmatprep.subr.mxu0 0.0
    %186 = vmatpush1.msra.mxu0 0.0
    %187 = vmatprep.subr.mxu0 0.0
    %188 = vmatpush1.msra.mxu0 0.0
    %189 = vmatprep.subr.mxu0 0.0
    %190 = vmatpush1.msra.mxu0 0.0
    %191 = vmatprep.subr.mxu0 0.0
    %192 = vmatpush1.msra.mxu0 0.0
    %193 = vmatprep.subr.mxu0 0.0
    %194 = vmatpush1.msra.mxu0 0.0
    %195 = vmatprep.subr.mxu0 0.0
    %196 = vmatpush1.msra.mxu0 0.0
    %197 = vmatprep.subr.mxu0 0.0
    %198 = vmatpush1.msra.mxu0 0.0
    %199 = vmatprep.subr.mxu0 0.0
    %200 = vmatpush1.msra.mxu0 0.0
    %201 = vmatprep.subr.mxu0 0.0
    %202 = vmatpush1.msra.mxu0 0.0
    %203 = vmatprep.subr.mxu0 0.0
    %204 = vmatpush1.msra.mxu0 0.0
    %205 = vmatprep.subr.mxu0 0.0
    %206 = vmatpush1.msra.mxu0 0.0
    %207 = vmatprep.subr.mxu0 0.0
    %208 = vmatpush1.msra.mxu0 0.0
    %209 = vmatprep.subr.mxu0 0.0
    %210 = vmatpush1.msra.mxu0 0.0
    %211 = vmatprep.subr.mxu0 0.0
    %212 = vmatpush1.msra.mxu0 0.0
    %213 = vmatprep.subr.mxu0 0.0
    %214 = vmatpush1.msra.mxu0 0.0
    %215 = vmatprep.subr.mxu0 0.0
    %216 = vmatpush1.msra.mxu0 0.0
    %217 = vmatprep.subr.mxu0 0.0
    %218 = vmatpush1.msra.mxu0 0.0
    %219 = vmatprep.subr.mxu0 0.0
    %220 = vmatpush1.msra.mxu0 0.0
    %221 = vmatprep.mubr.f32.mxu0 0.0
    %222 = vmatmul.mubr.f32.gmra.mrb[0].mxu0 %v152
    %v223 = vpop.f32.mrb[0].mxu0
    %v224 = vadd.f32 0.0, %v223
    %v225 = vpop.f32.mrb[0].mxu0
    %226 = vmatprep.mubr.f32.mxu0 0.0
    %227 = vmatmul.mubr.f32.gmra.mrb[0].mxu0 %v155
    %v228 = vpop.f32.mrb[0].mxu0
    %v229 = vadd.f32 0.0, %v228
    %v230 = vpop.f32.mrb[0].mxu0
    %231 = vdwg.mxu0
    %v232 = vadd.f32 %v140, %v224
    %v233 = vadd.f32 %v141, %v229
    %234 = vst.msk [vmem:[#allocation2] sm:$0xff] %vm48, %v232
    %235 = vst.msk [vmem:[#allocation2 + $0x8] sm:$0xff] %vm48, %v233
    // Predicated region
    $region26: #{tpu_custom_call.1} parent=1 // pred_check
      %p236 = pneg %p21
    $region27: #{tpu_custom_call.1} parent=1 // pred_check_branch
      %238 = sbr.rel (%p236) target = $region29
    $region28: #{tpu_custom_call.1} parent=1 // pred_region
      %v239 = vld [vmem:[#allocation2] sm:$0xff]
      %v240 = vld [vmem:[#allocation2 + $0x8] sm:$0xff]
      %241 = vst.msk [vmem:[#allocation3] sm:$0xff] %vm48, %v239
      %242 = vst.msk [vmem:[#allocation3 + $0x8] sm:$0xff] %vm48, %v240
    $region29: #{tpu_custom_call.1} parent=1 // pred_fallthru
      _
    // Predicated region
    $region30: #{tpu_custom_call.1} parent=1 // pred_check
      _
    $region31: #{tpu_custom_call.1} parent=1 // pred_check_branch
      %244 = sbr.rel (0) target = $region33
    $region32: #{tpu_custom_call.1} parent=1 // pred_region
      %s246 = ssub.s32 256, 256
      %247 = vsyncadd [#allocation4], %s246
      %s248 = sshll.u32 [#allocation3], 4
      %s249 = int_to_ptr.vmem [resolvable:$true] %s248
      %254 = dma.vmem_to_hbm [thread:$0]  %s249, 256, %s5, [#allocation4], 128, 128, 8
    $region33: #{tpu_custom_call.1} parent=1 // pred_fallthru
      _
    // Predicated region
    $region34: #{tpu_custom_call.1} parent=1 // pred_check
      _
    $region35: #{tpu_custom_call.1} parent=1 // pred_check_branch
      %256 = sbr.rel (0) target = $region37
    $region36: #{tpu_custom_call.1} parent=1 // pred_region
      %257 = dma.done [#allocation4], 256
    $region37: #{tpu_custom_call.1} parent=1 // pred_fallthru
      _
    %258 = vsyncpa [#allocation4], 1

</llo_original>
